<compile_context>
chip_gen: v5e
topology: v5e:2x2
jax: 0.10.0
libtpu: 0.0.40
codegen_flags: <defaults>
</compile_context>

<pallas_src>
from functools import partial

import jax
import jax.numpy as jnp
from jax import lax
from jax.experimental import pallas as pl
from jax.experimental.pallas import tpu as pltpu

EPS = 1e-5  # PyTorch InstanceNorm2d default (affine=False, biased variance)


def residual_block_kernel(wpos_ref, x_ref, w1_ref, w2_ref, o_ref, patches_ref,
                          *, H, W):
    # wpos_ref:    (1, HW)      int32, w-position (column index) of each lane
    # x_ref:       (1, C, HW)   f32 input image (lane-dense spatial)
    # w*_ref:      (C, 9*C)     bf16 conv weights, columns ordered (kh, kw, cin)
    # o_ref:       (1, C, HW)   f32 output
    # patches_ref: (9*C, HW)    bf16 persistent im2col scratch
    C = x_ref.shape[1]          # channels, already padded to a multiple of 16
    HW = H * W
    inv_hw = 1.0 / HW

    # Lane-position masks for the reflect-padding fix-ups (computed once,
    # hoisted out of both convs).
    lane = lax.broadcasted_iota(jnp.int32, (C, HW), 1)
    w_idx = jnp.broadcast_to(wpos_ref[...], (C, HW))
    is_w_first = w_idx == 0          # w == 0
    is_w_last = w_idx == W - 1       # w == W - 1
    is_h_first = lane < W            # h == 0
    is_h_last = lane >= HW - W       # h == H - 1

    def build_patches(z):
        # z: (C, HW) f32, row-major flat spatial (index = h*W + w).
        # Writes the 9 reflect-padded taps into patches_ref (bf16),
        # rows [t*C:(t+1)*C] for tap t = kh*3 + kw  (kh, kw in 0..2).
        # Column (w) shifts: lane rolls + reflect fix-up at w=0 / w=W-1.
        z_l = pltpu.roll(z, shift=1, axis=1)        # z[h, w-1] (wraps at w=0)
        z_r = pltpu.roll(z, shift=HW - 1, axis=1)   # z[h, w+1] (wraps at w=W-1)
        cols = (
            jnp.where(is_w_first, z_r, z_l),        # x[h, reflect(w-1)]
            z,                                      # x[h, w]
            jnp.where(is_w_last, z_l, z_r),         # x[h, reflect(w+1)]
        )
        for kw, c in enumerate(cols):
            # Row (h) shifts: lane rolls by +-W + reflect fix-up at h=0 / H-1.
            c_u = pltpu.roll(c, shift=W, axis=1)        # c[h-1, w]
            c_d = pltpu.roll(c, shift=HW - W, axis=1)   # c[h+1, w]
            rows = (
                jnp.where(is_h_first, c_d, c_u),        # x[reflect(h-1), .]
                c,
                jnp.where(is_h_last, c_u, c_d),         # x[reflect(h+1), .]
            )
            for kh, tap in enumerate(rows):
                t = kh * 3 + kw
                patches_ref[t * C:(t + 1) * C, :] = tap.astype(jnp.bfloat16)

    def conv3x3(z, w_ref):
        # One MXU matmul per conv: (C, 9C) x (9C, HW) -> (C, HW), f32 acc.
        # Bias omitted: it is exactly canceled by the following InstanceNorm.
        build_patches(z)
        return jnp.dot(w_ref[...], patches_ref[...],
                       preferred_element_type=jnp.float32)

    def instance_norm(y):
        # Two-pass per-channel mean/variance over the spatial (lane) axis:
        # same op count as one-pass E[x^2]-E[x]^2 but numerically stabler.
        mean = jnp.sum(y, axis=1, keepdims=True) * inv_hw
        d = y - mean
        var = jnp.sum(d * d, axis=1, keepdims=True) * inv_hw
        return d * lax.rsqrt(var + EPS)

    # conv1 -> IN -> ReLU
    h1 = jnp.maximum(instance_norm(conv3x3(x_ref[0], w1_ref)), 0.0)
    # conv2 -> IN
    h2 = instance_norm(conv3x3(h1, w2_ref))
    # Residual add: re-read x_ref here (keeps the f32 input's live range short).
    o_ref[0] = (x_ref[0] + h2).astype(o_ref.dtype)


def residual_block(x_nchw, w1, b1, w2, b2):
    """x: (N, C, H, W) f32; w*: (C, C, 3, 3) PyTorch OIHW; b*: (C,).

    Biases are accepted for parity with the PyTorch module but are not used:
    a per-channel constant added before InstanceNorm (affine=False) is exactly
    canceled by the mean subtraction.
    """
    del b1, b2
    N, C, H, W = x_nchw.shape
    assert H >= 2 and W >= 2, "reflect padding requires H, W >= 2"
    HW = H * W
    # Pad channels to a multiple of 16: aligned f32 sublanes AND aligned bf16
    # packed-tile rows for the im2col scratch writes.
    Cp = ((C + 15) // 16) * 16

    def prep_w(w):
        # (O, I, 3, 3) -> (O, kh, kw, I) -> zero-pad -> (Cp, 9*Cp) bf16.
        # Column order (kh, kw, cin) matches the im2col tap rows in the kernel.
        wm = jnp.transpose(w, (0, 2, 3, 1))
        wm = jnp.pad(wm, ((0, Cp - C), (0, 0), (0, 0), (0, Cp - C)))
        return wm.reshape(Cp, 9 * Cp).astype(jnp.bfloat16)

    w1m, w2m = prep_w(w1), prep_w(w2)

    # Lane-dense input: free contiguous reshape; zero-pad channels if needed
    # (padded channels stay exactly 0 through conv / IN / ReLU / residual).
    x_flat = x_nchw.reshape(N, C, HW)
    if Cp != C:
        x_flat = jnp.pad(x_flat, ((0, 0), (0, Cp - C), (0, 0)))

    # Per-lane column (w) position for the reflect fix-ups.
    wpos = jnp.tile(jnp.arange(W, dtype=jnp.int32), H).reshape(1, HW)

    # VMEM budget: derived from the tile footprint, capped well below v7x's
    # 64 MiB physical VMEM (v5e / v6e have 128 MiB so the cap is safe there).
    f32b, bf16b = 4, 2
    est = (2 * 2 * Cp * HW * f32b           # x + out blocks, double-buffered
           + 2 * 2 * Cp * 9 * Cp * bf16b    # w1 + w2, double-buffered
           + 2 * HW * 4                     # wpos
           + 9 * Cp * HW * bf16b            # im2col scratch
           + 20 * Cp * HW * f32b)           # headroom: rolls / IN temps / acc
    vmem_limit = int(min(56 * 2**20, max(32 * 2**20, est)))

    out_flat = pl.pallas_call(
        partial(residual_block_kernel, H=H, W=W),
        out_shape=jax.ShapeDtypeStruct((N, Cp, HW), x_nchw.dtype),
        grid_spec=pltpu.PrefetchScalarGridSpec(
            num_scalar_prefetch=0,
            grid=(N,),
            in_specs=[
                pl.BlockSpec((1, HW), lambda n: (0, 0)),           # wpos
                pl.BlockSpec((1, Cp, HW), lambda n: (n, 0, 0)),    # x
                pl.BlockSpec((Cp, 9 * Cp), lambda n: (0, 0)),      # w1
                pl.BlockSpec((Cp, 9 * Cp), lambda n: (0, 0)),      # w2
            ],
            out_specs=pl.BlockSpec((1, Cp, HW), lambda n: (n, 0, 0)),
            scratch_shapes=[pltpu.VMEM((9 * Cp, HW), jnp.bfloat16)],
        ),
        compiler_params=pltpu.CompilerParams(
            dimension_semantics=("parallel",),
            vmem_limit_bytes=vmem_limit,
        ),
    )(wpos, x_flat, w1m, w2m)

    # Slice off padded channels; contiguous reshape back to NCHW.
    return out_flat[:, :C, :].reshape(N, C, H, W)


# ---------------- pure-JAX f32 reference (for correctness check) ----------------
def _ref_conv_reflect(x_nchw, w, b):
    xp = jnp.pad(x_nchw, ((0, 0), (0, 0), (1, 1), (1, 1)), mode="reflect")
    y = lax.conv_general_dilated(
        xp, w, window_strides=(1, 1), padding="VALID",
        dimension_numbers=("NCHW", "OIHW", "NCHW"))
    return y + b[None, :, None, None]


def _ref_instance_norm(y):
    mean = jnp.mean(y, axis=(2, 3), keepdims=True)
    var = jnp.mean((y - mean) ** 2, axis=(2, 3), keepdims=True)
    return (y - mean) * lax.rsqrt(var + EPS)


def residual_block_ref(x, w1, b1, w2, b2):
    h = jnp.maximum(_ref_instance_norm(_ref_conv_reflect(x, w1, b1)), 0.0)
    h = _ref_instance_norm(_ref_conv_reflect(h, w2, b2))
    return x + h


if __name__ == "__main__":
    N, C, H, W = 2, 4, 16, 16
    key = jax.random.PRNGKey(0)
    kx, kw1, kb1, kw2, kb2 = jax.random.split(key, 5)

    x = jax.random.normal(kx, (N, C, H, W), dtype=jnp.float32)
    w1 = jax.random.normal(kw1, (C, C, 3, 3), dtype=jnp.float32) * 0.1
    b1 = jax.random.normal(kb1, (C,), dtype=jnp.float32) * 0.1
    w2 = jax.random.normal(kw2, (C, C, 3, 3), dtype=jnp.float32) * 0.1
    b2 = jax.random.normal(kb2, (C,), dtype=jnp.float32) * 0.1

    out = jax.block_until_ready(residual_block(x, w1, b1, w2, b2))
    ref = jax.block_until_ready(residual_block_ref(x, w1, b1, w2, b2))

    assert out.shape == (N, C, H, W)
    err = out - ref
    max_err = float(jnp.max(jnp.abs(err)))
    rms_err = float(jnp.sqrt(jnp.mean(err * err)))
    # bf16 MXU operands (f32 accumulation) vs an f32 reference: keep max-abs
    # loose; the RMS bound catches tap-ordering / layout regressions.
    assert max_err < 1e-1, max_err
    assert rms_err < 2.5e-2, rms_err
    print("KERNEL_OK")
</pallas_src>

<mosaic_0001>
module attributes {stable_mosaic.version = 11 : i64} {
  func.func @residual_block_kernel(%arg0: i32, %arg1: memref<1x256xi32, #tpu.memory_space<vmem>>, %arg2: memref<1x16x256xf32, #tpu.memory_space<vmem>>, %arg3: memref<16x144xbf16, #tpu.memory_space<vmem>>, %arg4: memref<16x144xbf16, #tpu.memory_space<vmem>>, %arg5: memref<1x16x256xf32, #tpu.memory_space<vmem>>, %arg6: memref<144x256xbf16, #tpu.memory_space<vmem>>) attributes {dimension_semantics = [#tpu.dimension_semantics<parallel>], iteration_bounds = array<i64: 2>, scalar_prefetch = 0 : i64, scratch_operands = 1 : i64, tpu.core_type = #tpu.core_type<tc>, window_params = [{pipeline_mode = #tpu.pipeline_mode<synchronous>, transform_indices = @transform_0, window_bounds = array<i64: 1, 256>}, {transform_indices = @transform_1, window_bounds = array<i64: 1, 16, 256>}, {pipeline_mode = #tpu.pipeline_mode<synchronous>, transform_indices = @transform_2, window_bounds = array<i64: 16, 144>}, {pipeline_mode = #tpu.pipeline_mode<synchronous>, transform_indices = @transform_3, window_bounds = array<i64: 16, 144>}, {transform_indices = @transform_4, window_bounds = array<i64: 1, 16, 256>}]} {
    %0 = tpu.iota {dimensions = array<i32: 1>} : vector<16x256xi32>
    %c0 = arith.constant 0 : index
    %c0_0 = arith.constant 0 : index
    %1 = vector.load %arg1[%c0, %c0_0] : memref<1x256xi32, #tpu.memory_space<vmem>>, vector<1x256xi32>
    %2 = vector.shape_cast %1 : vector<1x256xi32> to vector<1x256xi32>
    %3 = vector.broadcast %2 : vector<1x256xi32> to vector<16x256xi32>
    %c0_i32 = arith.constant 0 : i32
    %4 = vector.broadcast %c0_i32 : i32 to vector<16x256xi32>
    %5 = arith.cmpi eq, %3, %4 : vector<16x256xi32>
    %c15_i32 = arith.constant 15 : i32
    %6 = vector.broadcast %c15_i32 : i32 to vector<16x256xi32>
    %7 = arith.cmpi eq, %3, %6 : vector<16x256xi32>
    %c16_i32 = arith.constant 16 : i32
    %8 = vector.broadcast %c16_i32 : i32 to vector<16x256xi32>
    %9 = arith.cmpi slt, %0, %8 : vector<16x256xi32>
    %c240_i32 = arith.constant 240 : i32
    %10 = vector.broadcast %c240_i32 : i32 to vector<16x256xi32>
    %11 = arith.cmpi sge, %0, %10 : vector<16x256xi32>
    %c0_1 = arith.constant 0 : index
    %c0_2 = arith.constant 0 : index
    %c0_3 = arith.constant 0 : index
    %12 = vector.load %arg2[%c0_1, %c0_2, %c0_3] : memref<1x16x256xf32, #tpu.memory_space<vmem>>, vector<1x16x256xf32>
    %13 = vector.shape_cast %12 : vector<1x16x256xf32> to vector<16x256xf32>
    %c1_i32 = arith.constant 1 : i32
    %14 = tpu.dynamic_rotate %13 by %c1_i32 dim 1 : vector<16x256xf32>, i32 -> vector<16x256xf32>
    %c255_i32 = arith.constant 255 : i32
    %15 = tpu.dynamic_rotate %13 by %c255_i32 dim 1 : vector<16x256xf32>, i32 -> vector<16x256xf32>
    %16 = arith.select %5, %15, %14 : vector<16x256xi1>, vector<16x256xf32>
    %17 = arith.select %7, %14, %15 : vector<16x256xi1>, vector<16x256xf32>
    %c16_i32_4 = arith.constant 16 : i32
    %18 = tpu.dynamic_rotate %16 by %c16_i32_4 dim 1 : vector<16x256xf32>, i32 -> vector<16x256xf32>
    %c240_i32_5 = arith.constant 240 : i32
    %19 = tpu.dynamic_rotate %16 by %c240_i32_5 dim 1 : vector<16x256xf32>, i32 -> vector<16x256xf32>
    %20 = arith.select %9, %19, %18 : vector<16x256xi1>, vector<16x256xf32>
    %21 = arith.select %11, %18, %19 : vector<16x256xi1>, vector<16x256xf32>
    %22 = arith.truncf %20 : vector<16x256xf32> to vector<16x256xbf16>
    %c0_6 = arith.constant 0 : index
    %c0_7 = arith.constant 0 : index
    %23 = vector.load %arg6[%c0_6, %c0_7] : memref<144x256xbf16, #tpu.memory_space<vmem>>, vector<16x256xbf16>
    tpu.vector_store %arg6[%c0_6, %c0_7], %22 {strides = array<i32>} : memref<144x256xbf16, #tpu.memory_space<vmem>>, vector<16x256xbf16>,
    %24 = arith.truncf %16 : vector<16x256xf32> to vector<16x256xbf16>
    %c48 = arith.constant 48 : index
    %c0_8 = arith.constant 0 : index
    %25 = vector.load %arg6[%c48, %c0_8] : memref<144x256xbf16, #tpu.memory_space<vmem>>, vector<16x256xbf16>
    tpu.vector_store %arg6[%c48, %c0_8], %24 {strides = array<i32>} : memref<144x256xbf16, #tpu.memory_space<vmem>>, vector<16x256xbf16>,
    %26 = arith.truncf %21 : vector<16x256xf32> to vector<16x256xbf16>
    %c96 = arith.constant 96 : index
    %c0_9 = arith.constant 0 : index
    %27 = vector.load %arg6[%c96, %c0_9] : memref<144x256xbf16, #tpu.memory_space<vmem>>, vector<16x256xbf16>
    tpu.vector_store %arg6[%c96, %c0_9], %26 {strides = array<i32>} : memref<144x256xbf16, #tpu.memory_space<vmem>>, vector<16x256xbf16>,
    %c16_i32_10 = arith.constant 16 : i32
    %28 = tpu.dynamic_rotate %13 by %c16_i32_10 dim 1 : vector<16x256xf32>, i32 -> vector<16x256xf32>
    %c240_i32_11 = arith.constant 240 : i32
    %29 = tpu.dynamic_rotate %13 by %c240_i32_11 dim 1 : vector<16x256xf32>, i32 -> vector<16x256xf32>
    %30 = arith.select %9, %29, %28 : vector<16x256xi1>, vector<16x256xf32>
    %31 = arith.select %11, %28, %29 : vector<16x256xi1>, vector<16x256xf32>
    %32 = arith.truncf %30 : vector<16x256xf32> to vector<16x256xbf16>
    %c16 = arith.constant 16 : index
    %c0_12 = arith.constant 0 : index
    %33 = vector.load %arg6[%c16, %c0_12] : memref<144x256xbf16, #tpu.memory_space<vmem>>, vector<16x256xbf16>
    tpu.vector_store %arg6[%c16, %c0_12], %32 {strides = array<i32>} : memref<144x256xbf16, #tpu.memory_space<vmem>>, vector<16x256xbf16>,
    %34 = arith.truncf %13 : vector<16x256xf32> to vector<16x256xbf16>
    %c64 = arith.constant 64 : index
    %c0_13 = arith.constant 0 : index
    %35 = vector.load %arg6[%c64, %c0_13] : memref<144x256xbf16, #tpu.memory_space<vmem>>, vector<16x256xbf16>
    tpu.vector_store %arg6[%c64, %c0_13], %34 {strides = array<i32>} : memref<144x256xbf16, #tpu.memory_space<vmem>>, vector<16x256xbf16>,
    %36 = arith.truncf %31 : vector<16x256xf32> to vector<16x256xbf16>
    %c112 = arith.constant 112 : index
    %c0_14 = arith.constant 0 : index
    %37 = vector.load %arg6[%c112, %c0_14] : memref<144x256xbf16, #tpu.memory_space<vmem>>, vector<16x256xbf16>
    tpu.vector_store %arg6[%c112, %c0_14], %36 {strides = array<i32>} : memref<144x256xbf16, #tpu.memory_space<vmem>>, vector<16x256xbf16>,
    %c16_i32_15 = arith.constant 16 : i32
    %38 = tpu.dynamic_rotate %17 by %c16_i32_15 dim 1 : vector<16x256xf32>, i32 -> vector<16x256xf32>
    %c240_i32_16 = arith.constant 240 : i32
    %39 = tpu.dynamic_rotate %17 by %c240_i32_16 dim 1 : vector<16x256xf32>, i32 -> vector<16x256xf32>
    %40 = arith.select %9, %39, %38 : vector<16x256xi1>, vector<16x256xf32>
    %41 = arith.select %11, %38, %39 : vector<16x256xi1>, vector<16x256xf32>
    %42 = arith.truncf %40 : vector<16x256xf32> to vector<16x256xbf16>
    %c32 = arith.constant 32 : index
    %c0_17 = arith.constant 0 : index
    %43 = vector.load %arg6[%c32, %c0_17] : memref<144x256xbf16, #tpu.memory_space<vmem>>, vector<16x256xbf16>
    tpu.vector_store %arg6[%c32, %c0_17], %42 {strides = array<i32>} : memref<144x256xbf16, #tpu.memory_space<vmem>>, vector<16x256xbf16>,
    %44 = arith.truncf %17 : vector<16x256xf32> to vector<16x256xbf16>
    %c80 = arith.constant 80 : index
    %c0_18 = arith.constant 0 : index
    %45 = vector.load %arg6[%c80, %c0_18] : memref<144x256xbf16, #tpu.memory_space<vmem>>, vector<16x256xbf16>
    tpu.vector_store %arg6[%c80, %c0_18], %44 {strides = array<i32>} : memref<144x256xbf16, #tpu.memory_space<vmem>>, vector<16x256xbf16>,
    %46 = arith.truncf %41 : vector<16x256xf32> to vector<16x256xbf16>
    %c128 = arith.constant 128 : index
    %c0_19 = arith.constant 0 : index
    %47 = vector.load %arg6[%c128, %c0_19] : memref<144x256xbf16, #tpu.memory_space<vmem>>, vector<16x256xbf16>
    tpu.vector_store %arg6[%c128, %c0_19], %46 {strides = array<i32>} : memref<144x256xbf16, #tpu.memory_space<vmem>>, vector<16x256xbf16>,
    %c0_20 = arith.constant 0 : index
    %c0_21 = arith.constant 0 : index
    %48 = vector.load %arg3[%c0_20, %c0_21] : memref<16x144xbf16, #tpu.memory_space<vmem>>, vector<16x144xbf16>
    %c0_22 = arith.constant 0 : index
    %c0_23 = arith.constant 0 : index
    %49 = vector.load %arg6[%c0_22, %c0_23] : memref<144x256xbf16, #tpu.memory_space<vmem>>, vector<144x256xbf16>
    %cst = arith.constant dense<0.000000e+00> : vector<16x256xf32>
    %50 = tpu.matmul %48, %49, %cst {dimension_numbers = #tpu.dot_dimension_numbers<[1], [0], [0], [1], [0, 0, 1, 1], [], []>} : vector<16x144xbf16>, vector<144x256xbf16>, vector<16x256xf32> -> vector<16x256xf32>
    %cst_24 = arith.constant dense<0.000000e+00> : vector<16xf32>
    %51 = vector.multi_reduction <add>, %50, %cst_24 [1] : vector<16x256xf32> to vector<16xf32>
    %52 = vector.shape_cast %51 : vector<16xf32> to vector<16x1xf32>
    %cst_25 = arith.constant 3.906250e-03 : f32
    %53 = vector.broadcast %cst_25 : f32 to vector<16x1xf32>
    %54 = arith.mulf %52, %53 : vector<16x1xf32>
    %55 = vector.broadcast %54 : vector<16x1xf32> to vector<16x256xf32>
    %56 = arith.subf %50, %55 : vector<16x256xf32>
    %57 = arith.mulf %56, %56 : vector<16x256xf32>
    %cst_26 = arith.constant dense<0.000000e+00> : vector<16xf32>
    %58 = vector.multi_reduction <add>, %57, %cst_26 [1] : vector<16x256xf32> to vector<16xf32>
    %59 = vector.shape_cast %58 : vector<16xf32> to vector<16x1xf32>
    %cst_27 = arith.constant 3.906250e-03 : f32
    %60 = vector.broadcast %cst_27 : f32 to vector<16x1xf32>
    %61 = arith.mulf %59, %60 : vector<16x1xf32>
    %cst_28 = arith.constant 9.99999974E-6 : f32
    %62 = vector.broadcast %cst_28 : f32 to vector<16x1xf32>
    %63 = arith.addf %61, %62 : vector<16x1xf32>
    %64 = math.rsqrt %63 : vector<16x1xf32>
    %65 = vector.broadcast %64 : vector<16x1xf32> to vector<16x256xf32>
    %66 = arith.mulf %56, %65 : vector<16x256xf32>
    %cst_29 = arith.constant 0.000000e+00 : f32
    %67 = vector.broadcast %cst_29 : f32 to vector<16x256xf32>
    %68 = arith.maximumf %66, %67 : vector<16x256xf32>
    %c1_i32_30 = arith.constant 1 : i32
    %69 = tpu.dynamic_rotate %68 by %c1_i32_30 dim 1 : vector<16x256xf32>, i32 -> vector<16x256xf32>
    %c255_i32_31 = arith.constant 255 : i32
    %70 = tpu.dynamic_rotate %68 by %c255_i32_31 dim 1 : vector<16x256xf32>, i32 -> vector<16x256xf32>
    %71 = arith.select %5, %70, %69 : vector<16x256xi1>, vector<16x256xf32>
    %72 = arith.select %7, %69, %70 : vector<16x256xi1>, vector<16x256xf32>
    %c16_i32_32 = arith.constant 16 : i32
    %73 = tpu.dynamic_rotate %71 by %c16_i32_32 dim 1 : vector<16x256xf32>, i32 -> vector<16x256xf32>
    %c240_i32_33 = arith.constant 240 : i32
    %74 = tpu.dynamic_rotate %71 by %c240_i32_33 dim 1 : vector<16x256xf32>, i32 -> vector<16x256xf32>
    %75 = arith.select %9, %74, %73 : vector<16x256xi1>, vector<16x256xf32>
    %76 = arith.select %11, %73, %74 : vector<16x256xi1>, vector<16x256xf32>
    %77 = arith.truncf %75 : vector<16x256xf32> to vector<16x256xbf16>
    %c0_34 = arith.constant 0 : index
    %c0_35 = arith.constant 0 : index
    %78 = vector.load %arg6[%c0_34, %c0_35] : memref<144x256xbf16, #tpu.memory_space<vmem>>, vector<16x256xbf16>
    tpu.vector_store %arg6[%c0_34, %c0_35], %77 {strides = array<i32>} : memref<144x256xbf16, #tpu.memory_space<vmem>>, vector<16x256xbf16>,
    %79 = arith.truncf %71 : vector<16x256xf32> to vector<16x256xbf16>
    %c48_36 = arith.constant 48 : index
    %c0_37 = arith.constant 0 : index
    %80 = vector.load %arg6[%c48_36, %c0_37] : memref<144x256xbf16, #tpu.memory_space<vmem>>, vector<16x256xbf16>
    tpu.vector_store %arg6[%c48_36, %c0_37], %79 {strides = array<i32>} : memref<144x256xbf16, #tpu.memory_space<vmem>>, vector<16x256xbf16>,
    %81 = arith.truncf %76 : vector<16x256xf32> to vector<16x256xbf16>
    %c96_38 = arith.constant 96 : index
    %c0_39 = arith.constant 0 : index
    %82 = vector.load %arg6[%c96_38, %c0_39] : memref<144x256xbf16, #tpu.memory_space<vmem>>, vector<16x256xbf16>
    tpu.vector_store %arg6[%c96_38, %c0_39], %81 {strides = array<i32>} : memref<144x256xbf16, #tpu.memory_space<vmem>>, vector<16x256xbf16>,
    %c16_i32_40 = arith.constant 16 : i32
    %83 = tpu.dynamic_rotate %68 by %c16_i32_40 dim 1 : vector<16x256xf32>, i32 -> vector<16x256xf32>
    %c240_i32_41 = arith.constant 240 : i32
    %84 = tpu.dynamic_rotate %68 by %c240_i32_41 dim 1 : vector<16x256xf32>, i32 -> vector<16x256xf32>
    %85 = arith.select %9, %84, %83 : vector<16x256xi1>, vector<16x256xf32>
    %86 = arith.select %11, %83, %84 : vector<16x256xi1>, vector<16x256xf32>
    %87 = arith.truncf %85 : vector<16x256xf32> to vector<16x256xbf16>
    %c16_42 = arith.constant 16 : index
    %c0_43 = arith.constant 0 : index
    %88 = vector.load %arg6[%c16_42, %c0_43] : memref<144x256xbf16, #tpu.memory_space<vmem>>, vector<16x256xbf16>
    tpu.vector_store %arg6[%c16_42, %c0_43], %87 {strides = array<i32>} : memref<144x256xbf16, #tpu.memory_space<vmem>>, vector<16x256xbf16>,
    %89 = arith.truncf %68 : vector<16x256xf32> to vector<16x256xbf16>
    %c64_44 = arith.constant 64 : index
    %c0_45 = arith.constant 0 : index
    %90 = vector.load %arg6[%c64_44, %c0_45] : memref<144x256xbf16, #tpu.memory_space<vmem>>, vector<16x256xbf16>
    tpu.vector_store %arg6[%c64_44, %c0_45], %89 {strides = array<i32>} : memref<144x256xbf16, #tpu.memory_space<vmem>>, vector<16x256xbf16>,
    %91 = arith.truncf %86 : vector<16x256xf32> to vector<16x256xbf16>
    %c112_46 = arith.constant 112 : index
    %c0_47 = arith.constant 0 : index
    %92 = vector.load %arg6[%c112_46, %c0_47] : memref<144x256xbf16, #tpu.memory_space<vmem>>, vector<16x256xbf16>
    tpu.vector_store %arg6[%c112_46, %c0_47], %91 {strides = array<i32>} : memref<144x256xbf16, #tpu.memory_space<vmem>>, vector<16x256xbf16>,
    %c16_i32_48 = arith.constant 16 : i32
    %93 = tpu.dynamic_rotate %72 by %c16_i32_48 dim 1 : vector<16x256xf32>, i32 -> vector<16x256xf32>
    %c240_i32_49 = arith.constant 240 : i32
    %94 = tpu.dynamic_rotate %72 by %c240_i32_49 dim 1 : vector<16x256xf32>, i32 -> vector<16x256xf32>
    %95 = arith.select %9, %94, %93 : vector<16x256xi1>, vector<16x256xf32>
    %96 = arith.select %11, %93, %94 : vector<16x256xi1>, vector<16x256xf32>
    %97 = arith.truncf %95 : vector<16x256xf32> to vector<16x256xbf16>
    %c32_50 = arith.constant 32 : index
    %c0_51 = arith.constant 0 : index
    %98 = vector.load %arg6[%c32_50, %c0_51] : memref<144x256xbf16, #tpu.memory_space<vmem>>, vector<16x256xbf16>
    tpu.vector_store %arg6[%c32_50, %c0_51], %97 {strides = array<i32>} : memref<144x256xbf16, #tpu.memory_space<vmem>>, vector<16x256xbf16>,
    %99 = arith.truncf %72 : vector<16x256xf32> to vector<16x256xbf16>
    %c80_52 = arith.constant 80 : index
    %c0_53 = arith.constant 0 : index
    %100 = vector.load %arg6[%c80_52, %c0_53] : memref<144x256xbf16, #tpu.memory_space<vmem>>, vector<16x256xbf16>
    tpu.vector_store %arg6[%c80_52, %c0_53], %99 {strides = array<i32>} : memref<144x256xbf16, #tpu.memory_space<vmem>>, vector<16x256xbf16>,
    %101 = arith.truncf %96 : vector<16x256xf32> to vector<16x256xbf16>
    %c128_54 = arith.constant 128 : index
    %c0_55 = arith.constant 0 : index
    %102 = vector.load %arg6[%c128_54, %c0_55] : memref<144x256xbf16, #tpu.memory_space<vmem>>, vector<16x256xbf16>
    tpu.vector_store %arg6[%c128_54, %c0_55], %101 {strides = array<i32>} : memref<144x256xbf16, #tpu.memory_space<vmem>>, vector<16x256xbf16>,
    %c0_56 = arith.constant 0 : index
    %c0_57 = arith.constant 0 : index
    %103 = vector.load %arg4[%c0_56, %c0_57] : memref<16x144xbf16, #tpu.memory_space<vmem>>, vector<16x144xbf16>
    %c0_58 = arith.constant 0 : index
    %c0_59 = arith.constant 0 : index
    %104 = vector.load %arg6[%c0_58, %c0_59] : memref<144x256xbf16, #tpu.memory_space<vmem>>, vector<144x256xbf16>
    %cst_60 = arith.constant dense<0.000000e+00> : vector<16x256xf32>
    %105 = tpu.matmul %103, %104, %cst_60 {dimension_numbers = #tpu.dot_dimension_numbers<[1], [0], [0], [1], [0, 0, 1, 1], [], []>} : vector<16x144xbf16>, vector<144x256xbf16>, vector<16x256xf32> -> vector<16x256xf32>
    %cst_61 = arith.constant dense<0.000000e+00> : vector<16xf32>
    %106 = vector.multi_reduction <add>, %105, %cst_61 [1] : vector<16x256xf32> to vector<16xf32>
    %107 = vector.shape_cast %106 : vector<16xf32> to vector<16x1xf32>
    %cst_62 = arith.constant 3.906250e-03 : f32
    %108 = vector.broadcast %cst_62 : f32 to vector<16x1xf32>
    %109 = arith.mulf %107, %108 : vector<16x1xf32>
    %110 = vector.broadcast %109 : vector<16x1xf32> to vector<16x256xf32>
    %111 = arith.subf %105, %110 : vector<16x256xf32>
    %112 = arith.mulf %111, %111 : vector<16x256xf32>
    %cst_63 = arith.constant dense<0.000000e+00> : vector<16xf32>
    %113 = vector.multi_reduction <add>, %112, %cst_63 [1] : vector<16x256xf32> to vector<16xf32>
    %114 = vector.shape_cast %113 : vector<16xf32> to vector<16x1xf32>
    %cst_64 = arith.constant 3.906250e-03 : f32
    %115 = vector.broadcast %cst_64 : f32 to vector<16x1xf32>
    %116 = arith.mulf %114, %115 : vector<16x1xf32>
    %cst_65 = arith.constant 9.99999974E-6 : f32
    %117 = vector.broadcast %cst_65 : f32 to vector<16x1xf32>
    %118 = arith.addf %116, %117 : vector<16x1xf32>
    %119 = math.rsqrt %118 : vector<16x1xf32>
    %120 = vector.broadcast %119 : vector<16x1xf32> to vector<16x256xf32>
    %121 = arith.mulf %111, %120 : vector<16x256xf32>
    %c0_66 = arith.constant 0 : index
    %c0_67 = arith.constant 0 : index
    %c0_68 = arith.constant 0 : index
    %122 = vector.load %arg2[%c0_66, %c0_67, %c0_68] : memref<1x16x256xf32, #tpu.memory_space<vmem>>, vector<1x16x256xf32>
    %123 = vector.shape_cast %122 : vector<1x16x256xf32> to vector<16x256xf32>
    %124 = arith.addf %123, %121 : vector<16x256xf32>
    %c0_69 = arith.constant 0 : index
    %c0_70 = arith.constant 0 : index
    %c0_71 = arith.constant 0 : index
    %125 = vector.load %arg5[%c0_69, %c0_70, %c0_71] : memref<1x16x256xf32, #tpu.memory_space<vmem>>, vector<1x16x256xf32>
    %126 = vector.shape_cast %125 : vector<1x16x256xf32> to vector<16x256xf32>
    %127 = vector.shape_cast %124 : vector<16x256xf32> to vector<1x16x256xf32>
    tpu.vector_store %arg5[%c0_69, %c0_70, %c0_71], %127 {strides = array<i32>} : memref<1x16x256xf32, #tpu.memory_space<vmem>>, vector<1x16x256xf32>,
    return
  }
  func.func @transform_0(%arg0: i32) -> (i32, i32) {
    %c0_i32 = arith.constant 0 : i32
    %c0_i32_0 = arith.constant 0 : i32
    %c0_i32_1 = arith.constant 0 : i32
    return %c0_i32, %c0_i32_0 : i32, i32
  }
  func.func @transform_1(%arg0: i32) -> (i32, i32, i32) {
    %c0_i32 = arith.constant 0 : i32
    %c0_i32_0 = arith.constant 0 : i32
    %c0_i32_1 = arith.constant 0 : i32
    return %arg0, %c0_i32, %c0_i32_0 : i32, i32, i32
  }
  func.func @transform_2(%arg0: i32) -> (i32, i32) {
    %c0_i32 = arith.constant 0 : i32
    %c0_i32_0 = arith.constant 0 : i32
    %c0_i32_1 = arith.constant 0 : i32
    return %c0_i32, %c0_i32_0 : i32, i32
  }
  func.func @transform_3(%arg0: i32) -> (i32, i32) {
    %c0_i32 = arith.constant 0 : i32
    %c0_i32_0 = arith.constant 0 : i32
    %c0_i32_1 = arith.constant 0 : i32
    return %c0_i32, %c0_i32_0 : i32, i32
  }
  func.func @transform_4(%arg0: i32) -> (i32, i32, i32) {
    %c0_i32 = arith.constant 0 : i32
    %c0_i32_0 = arith.constant 0 : i32
    %c0_i32_1 = arith.constant 0 : i32
    return %arg0, %c0_i32, %c0_i32_0 : i32, i32, i32
  }
}

</mosaic_0001>

<llo_original>
// kernel: tpu_custom_call.1
$region0: #{tpu_custom_call.1}
  #allocation0 [shape = 'u32[]', space=smem, size = 0x4, offset = 0x4, fixed_abs, tag = 'smem constant byte address 0x4 - core index']
  #allocation1 [shape = 'u32[72,128]{1,0:T(1,128)}', space=vmem, size = 0x9000, scoped, tag = 'internal scratch']
  #allocation2 [shape = 'bf16[144,256]{1,0:T(8,128)(2,1)}', space=vmem, size = 0x12000, scoped, tag = 'scratch operand']
  %s0 = inlined_call_operand.hbm [shape: s32[1,256], index: 0, kind: input, shape index: {}]
  %s1 = inlined_call_operand.hbm [shape: f32[2,16,256], index: 1, kind: input, shape index: {}]
  %s2 = inlined_call_operand.hbm [shape: bf16[16,144], index: 2, kind: input, shape index: {}]
  %s3 = inlined_call_operand.hbm [shape: bf16[16,144], index: 3, kind: input, shape index: {}]
  %s4 = inlined_call_operand.hbm [shape: f32[2,16,256], index: 4, kind: output, shape index: {}]
  %s5 = sld [smem:[#allocation0]]
  $region65: #{tpu_custom_call.1} parent=0
    _
  %s7 = ssub.s32 1, %s5
  %s8 = scalar_select 0, %s7, %s5
  $region1: #{tpu_custom_call.1} parent=0
    #allocation3 [shape = 'u8[1024]{0}', space=vmem, size = 0x400, scoped, tag = 'input window, operand 0, single buffered']
    #allocation4 [shape = 's32[2]{0}', space=sflag, size = 0x8, scoped, tag = 'scoped memory for tpu_custom_call.1']
    #allocation5 [shape = 's32[2]{0}', space=sflag, size = 0x8, scoped, tag = 'scoped memory for tpu_custom_call.1']
    #allocation6 [shape = 'u8[32768]{0}', space=vmem, size = 0x8000, scoped, tag = 'input window, operand 1']
    #allocation7 [shape = 's32[2]{0}', space=sflag, size = 0x8, scoped, tag = 'scoped memory for tpu_custom_call.1']
    #allocation8 [shape = 'u8[8192]{0}', space=vmem, size = 0x2000, scoped, tag = 'input window, operand 2, single buffered']
    #allocation9 [shape = 'u8[8192]{0}', space=vmem, size = 0x2000, scoped, tag = 'input window, operand 3, single buffered']
    #allocation10 [shape = 's32[1]{0}', space=sflag, size = 0x4, scoped, tag = 'scoped memory for tpu_custom_call.1']
    #allocation11 [shape = 'u8[32768]{0}', space=vmem, size = 0x8000, scoped, tag = 'output window, operand 0']
    %9 = vsyncpa [#allocation4], 0
    %10 = vsyncpa [#allocation7], 0
    %s11 = scalar_lea.sflag [#allocation7], 1
    %12 = vsyncpa %s11, 0
    %13 = vsyncpa [#allocation10], 0
    %14 = vsyncpa [#allocation5], 0
    %s15 = scalar_lea.sflag [#allocation5], 1
    %16 = vsyncpa %s15, 0
    loop: start=0, step=1, limit=4
    $region2: #{tpu_custom_call.1} parent=1 // loop_pre_header
      _
    $region3: #{tpu_custom_call.1} parent=1 // loop_header
      %s18 = sphi 0, %s22
      %p19 = scmp.ge.s32.totalorder %s18, 4
      %s26 = sphi 0, %s26
      %s28 = sphi 0, %s26
      %s29 = sphi 0, %s28
      %s43 = sphi 0, %s29
      %s49 = sphi 0, %s51
      %s52 = sphi 0, %s49
      %s53 = sphi 0, %s52
      %s69 = sphi 0, %s53
      %s73 = sphi 0, %s73
      %s75 = sphi 0, %s73
      %s76 = sphi 0, %s75
      %s90 = sphi 0, %s76
      %s94 = sphi 0, %s94
      %s96 = sphi 0, %s94
      %s97 = sphi 0, %s96
      %s111 = sphi 0, %s97
      %s117 = sphi 0, %s119
      %s120 = sphi 0, %s117
      %s121 = sphi 0, %s120
      %s137 = sphi 0, %s121
    $region4: #{tpu_custom_call.1} parent=1 // loop_header_branch
      %21 = sbr.rel (%p19) target = $region8
    $region5: #{tpu_custom_call.1} parent=1 // loop_body
      %s23 = ssub.s32 %s18, 1
      %s24 = ssub.s32 %s18, 2
      %s25 = sadd.s32 %s18, 1
      %s27 = sadd.s32 %s26, 1
      %p30 = scmp.eq.s32.totalorder %s18, 1
      %p31 = scmp.ne.s32.totalorder %s26, %s28
      %p32 = scmp.eq.s32.totalorder %s18, 0
      %p33 = por %p31, %p32
      %p34 = scmp.ne.s32.totalorder %s26, %s28
      %p35 = scmp.eq.s32.totalorder %s23, 1
      %p36 = por %p34, %p35
      %p37 = scmp.ne.s32.totalorder %s28, %s29
      %p38 = scmp.eq.s32.totalorder %s23, 0
      %p39 = por %p37, %p38
      %p40 = scmp.ne.s32.totalorder %s28, %s29
      %p41 = scmp.eq.s32.totalorder %s24, 1
      %p42 = por %p40, %p41
      %p44 = scmp.ne.s32.totalorder %s29, %s43
      %p45 = scmp.eq.s32.totalorder %s24, 0
      %p46 = por %p44, %p45
      %s47 = ssub.s32 %s18, %s25
      %p48 = scmp.eq.s32.totalorder %s47, 0
      %s50 = sadd.s32 %s49, 1
      %s51 = scalar_select %p48, %s49, %s50
      %p54 = pneg %p48
      %p55 = scmp.eq.s32.totalorder %s18, 1
      %p56 = por %p54, %p55
      %p57 = scmp.ne.s32.totalorder %s49, %s52
      %p58 = scmp.eq.s32.totalorder %s18, 0
      %p59 = por %p57, %p58
      %p60 = scmp.ne.s32.totalorder %s49, %s52
      %p61 = scmp.eq.s32.totalorder %s23, 1
      %p62 = por %p60, %p61
      %p63 = scmp.ne.s32.totalorder %s52, %s53
      %p64 = scmp.eq.s32.totalorder %s23, 0
      %p65 = por %p63, %p64
      %p66 = scmp.ne.s32.totalorder %s52, %s53
      %p67 = scmp.eq.s32.totalorder %s24, 1
      %p68 = por %p66, %p67
      %p70 = scmp.ne.s32.totalorder %s53, %s69
      %p71 = scmp.eq.s32.totalorder %s24, 0
      %p72 = por %p70, %p71
      %s74 = sadd.s32 %s73, 1
      %p77 = scmp.eq.s32.totalorder %s18, 1
      %p78 = scmp.ne.s32.totalorder %s73, %s75
      %p79 = scmp.eq.s32.totalorder %s18, 0
      %p80 = por %p78, %p79
      %p81 = scmp.ne.s32.totalorder %s73, %s75
      %p82 = scmp.eq.s32.totalorder %s23, 1
      %p83 = por %p81, %p82
      %p84 = scmp.ne.s32.totalorder %s75, %s76
      %p85 = scmp.eq.s32.totalorder %s23, 0
      %p86 = por %p84, %p85
      %p87 = scmp.ne.s32.totalorder %s75, %s76
      %p88 = scmp.eq.s32.totalorder %s24, 1
      %p89 = por %p87, %p88
      %p91 = scmp.ne.s32.totalorder %s76, %s90
      %p92 = scmp.eq.s32.totalorder %s24, 0
      %p93 = por %p91, %p92
      %s95 = sadd.s32 %s94, 1
      %p98 = scmp.eq.s32.totalorder %s18, 1
      %p99 = scmp.ne.s32.totalorder %s94, %s96
      %p100 = scmp.eq.s32.totalorder %s18, 0
      %p101 = por %p99, %p100
      %p102 = scmp.ne.s32.totalorder %s94, %s96
      %p103 = scmp.eq.s32.totalorder %s23, 1
      %p104 = por %p102, %p103
      %p105 = scmp.ne.s32.totalorder %s96, %s97
      %p106 = scmp.eq.s32.totalorder %s23, 0
      %p107 = por %p105, %p106
      %p108 = scmp.ne.s32.totalorder %s96, %s97
      %p109 = scmp.eq.s32.totalorder %s24, 1
      %p110 = por %p108, %p109
      %p112 = scmp.ne.s32.totalorder %s97, %s111
      %p113 = scmp.eq.s32.totalorder %s24, 0
      %p114 = por %p112, %p113
      %s115 = ssub.s32 %s18, %s25
      %p116 = scmp.eq.s32.totalorder %s115, 0
      %s118 = sadd.s32 %s117, 1
      %s119 = scalar_select %p116, %s117, %s118
      %p122 = pneg %p116
      %p123 = scmp.eq.s32.totalorder %s18, 1
      %p124 = por %p122, %p123
      %p125 = scmp.ne.s32.totalorder %s117, %s120
      %p126 = scmp.eq.s32.totalorder %s18, 0
      %p127 = por %p125, %p126
      %p128 = scmp.ne.s32.totalorder %s117, %s120
      %p129 = scmp.eq.s32.totalorder %s23, 1
      %p130 = por %p128, %p129
      %p131 = scmp.ne.s32.totalorder %s120, %s121
      %p132 = scmp.eq.s32.totalorder %s23, 0
      %p133 = por %p131, %p132
      %p134 = scmp.ne.s32.totalorder %s120, %s121
      %p135 = scmp.eq.s32.totalorder %s24, 1
      %p136 = por %p134, %p135
      %p138 = scmp.ne.s32.totalorder %s121, %s137
      %p139 = scmp.eq.s32.totalorder %s24, 0
      %p140 = por %p138, %p139
      %p141 = scmp.le.s32.totalorder 1, %s18
      %p142 = scmp.lt.s32.totalorder %s18, 3
      %p143 = pnand %p141, %p142
      %p144 = pneg %p143
      // Predicated region
      $region9: #{tpu_custom_call.1} parent=5 // pred_check
        _
      $region10: #{tpu_custom_call.1} parent=5 // pred_check_branch
        %146 = sbr.rel (%p143) target = $region12
      $region11: #{tpu_custom_call.1} parent=5 // pred_region
        %s147 = ssub.s32 %s18, 1
        // Predicated region
        $region13: #{tpu_custom_call.1} parent=11 // pred_check
          %p148 = pneg %p39
        $region14: #{tpu_custom_call.1} parent=11 // pred_check_branch
          %150 = sbr.rel (%p148) target = $region16
        $region15: #{tpu_custom_call.1} parent=11 // pred_region
          %152 = vsyncadd [#allocation4], 0
          %s154 = sshll.u32 %s0, 4
          %s155 = int_to_ptr.hbm [resolvable:$true] %s154
          %s156 = sshll.u32 [#allocation3], 4
          %s157 = int_to_ptr.vmem [resolvable:$true] %s156
          %159 = dma.hbm_to_vmem [thread:$0]  %s155, 32, %s157, [#allocation4]
        $region16: #{tpu_custom_call.1} parent=11 // pred_fallthru
          _
        // Predicated region
        $region17: #{tpu_custom_call.1} parent=11 // pred_check
          %p160 = pneg %p86
        $region18: #{tpu_custom_call.1} parent=11 // pred_check_branch
          %162 = sbr.rel (%p160) target = $region20
        $region19: #{tpu_custom_call.1} parent=11 // pred_region
          %164 = vsyncadd [#allocation7], 0
          %s165 = sshll.u32 %s2, 4
          %s166 = int_to_ptr.hbm [resolvable:$true] %s165
          %s167 = sshll.u32 [#allocation8], 4
          %s168 = int_to_ptr.vmem [resolvable:$true] %s167
          %173 = dma.hbm_to_vmem [thread:$0]  %s166, 256, %s168, [#allocation7], 128, 128, 8
        $region20: #{tpu_custom_call.1} parent=11 // pred_fallthru
          _
        // Predicated region
        $region21: #{tpu_custom_call.1} parent=11 // pred_check
          %p174 = pneg %p107
        $region22: #{tpu_custom_call.1} parent=11 // pred_check_branch
          %176 = sbr.rel (%p174) target = $region24
        $region23: #{tpu_custom_call.1} parent=11 // pred_region
          %178 = vsyncadd [#allocation10], 0
          %s179 = sshll.u32 %s3, 4
          %s180 = int_to_ptr.hbm [resolvable:$true] %s179
          %s181 = sshll.u32 [#allocation9], 4
          %s182 = int_to_ptr.vmem [resolvable:$true] %s181
          %187 = dma.hbm_to_vmem [thread:$0]  %s180, 256, %s182, [#allocation10], 128, 128, 8
        $region24: #{tpu_custom_call.1} parent=11 // pred_fallthru
          _
      $region12: #{tpu_custom_call.1} parent=5 // pred_fallthru
        _
      %p188 = scmp.lt.s32.totalorder %s18, 2
      // Predicated region
      $region25: #{tpu_custom_call.1} parent=5 // pred_check
        %p189 = pneg %p188
      $region26: #{tpu_custom_call.1} parent=5 // pred_check_branch
        %191 = sbr.rel (%p189) target = $region28
      $region27: #{tpu_custom_call.1} parent=5 // pred_region
        // Predicated region
        $region29: #{tpu_custom_call.1} parent=27 // pred_check
          %p192 = pneg %p59
        $region30: #{tpu_custom_call.1} parent=27 // pred_check_branch
          %194 = sbr.rel (%p192) target = $region32
        $region31: #{tpu_custom_call.1} parent=27 // pred_region
          %s195 = sand.u32 %s18, 1
          %s196 = scalar_lea.sflag [#allocation7], %s195
          %s197 = sand.u32 %s49, 1
          %s198 = smul.addr %s197, 32
          %s199 = scalar_lea.vmem [#allocation6], %s198
          %201 = vsyncadd %s196, 0
          %s202 = smul.addr %s18, 4
          %s203 = smul.addr %s202, 8
          %s204 = scalar_lea.hbm %s1, %s203
          %s205 = sshll.u32 %s204, 4
          %s206 = int_to_ptr.hbm [resolvable:$true] %s205
          %s207 = sshll.u32 %s199, 4
          %s208 = int_to_ptr.vmem [resolvable:$true] %s207
          %213 = dma.hbm_to_vmem [thread:$0]  %s206, 512, %s208, %s196, 256, 256, 16
        $region32: #{tpu_custom_call.1} parent=27 // pred_fallthru
          _
      $region28: #{tpu_custom_call.1} parent=5 // pred_fallthru
        _
      %p214 = scmp.le.s32.totalorder 1, %s18
      %p215 = scmp.lt.s32.totalorder %s18, 3
      %p216 = pnand %p214, %p215
      %p217 = pneg %p216
      // Predicated region
      $region33: #{tpu_custom_call.1} parent=5 // pred_check
        _
      $region34: #{tpu_custom_call.1} parent=5 // pred_check_branch
        %219 = sbr.rel (%p216) target = $region36
      $region35: #{tpu_custom_call.1} parent=5 // pred_region
        %s220 = ssub.s32 %s18, 1
        // Predicated region
        $region37: #{tpu_custom_call.1} parent=35 // pred_check
          %p221 = pneg %p39
        $region38: #{tpu_custom_call.1} parent=35 // pred_check_branch
          %223 = sbr.rel (%p221) target = $region40
        $region39: #{tpu_custom_call.1} parent=35 // pred_region
          %225 = dma.done [#allocation4], 32
        $region40: #{tpu_custom_call.1} parent=35 // pred_fallthru
          _
        %s226 = sand.u32 %s23, 1
        %s227 = scalar_lea.sflag [#allocation7], %s226
        %s228 = sand.u32 %s52, 1
        %s229 = smul.addr %s228, 32
        %s230 = scalar_lea.vmem [#allocation6], %s229
        // Predicated region
        $region41: #{tpu_custom_call.1} parent=35 // pred_check
          %p231 = pneg %p65
        $region42: #{tpu_custom_call.1} parent=35 // pred_check_branch
          %233 = sbr.rel (%p231) target = $region44
        $region43: #{tpu_custom_call.1} parent=35 // pred_region
          %235 = dma.done %s227, 512
        $region44: #{tpu_custom_call.1} parent=35 // pred_fallthru
          _
        // Predicated region
        $region45: #{tpu_custom_call.1} parent=35 // pred_check
          %p236 = pneg %p86
        $region46: #{tpu_custom_call.1} parent=35 // pred_check_branch
          %238 = sbr.rel (%p236) target = $region48
        $region47: #{tpu_custom_call.1} parent=35 // pred_region
          %240 = dma.done [#allocation7], 256
        $region48: #{tpu_custom_call.1} parent=35 // pred_fallthru
          _
        // Predicated region
        $region49: #{tpu_custom_call.1} parent=35 // pred_check
          %p241 = pneg %p107
        $region50: #{tpu_custom_call.1} parent=35 // pred_check_branch
          %243 = sbr.rel (%p241) target = $region52
        $region51: #{tpu_custom_call.1} parent=35 // pred_region
          %245 = dma.done [#allocation10], 256
        $region52: #{tpu_custom_call.1} parent=35 // pred_fallthru
          _
        %p246 = pneg %p39
        %p247 = pneg %p36
        %s248 = sand.u32 %s23, 1
        %s249 = scalar_lea.sflag [#allocation7], %s248
        %s250 = sand.u32 %s52, 1
        %s251 = smul.addr %s250, 32
        %s252 = scalar_lea.vmem [#allocation6], %s251
        %p253 = pneg %p65
        %p254 = pneg %p62
        %p255 = pneg %p86
        %p256 = pneg %p83
        %p257 = pneg %p107
        %p258 = pneg %p104
        %p259 = pneg %p133
        %p260 = pneg %p130
        %s261 = sand.u32 %s120, 1
        %s262 = scalar_lea.sflag [#allocation5], %s261
        %s263 = sand.u32 %s120, 1
        %s264 = smul.addr %s263, 32
        %s265 = scalar_lea.vmem [#allocation11], %s264
        %v267 = vlaneseq
        %v268 = vand.u32 %v267, 127
        %v269 = vadd.s32 %v268, 128
        %v270 = vld [vmem:[#allocation3] sm:$0x3]
        %v271 = vperm.slane %v270, 0
        %v272 = vperm.slane %v270, 1
        %vm273 = vcmp.eq.s32.totalorder %v271, 0
        %vm274 = vcmp.eq.s32.totalorder %v272, 0
        %vm275 = vcmp.eq.s32.totalorder %v271, 15
        %vm276 = vcmp.eq.s32.totalorder %v272, 15
        %vm277 = vcmp.lt.s32.totalorder %v268, 16
        %vm278 = vcmp.lt.s32.totalorder %v269, 16
        %vm279 = vcmp.ge.s32.totalorder %v268, 240
        %vm280 = vcmp.ge.s32.totalorder %v269, 240
        %v281 = vld [vmem:[%s230] sm:$0xff]
        %v282 = vld [vmem:[%s230 + $0x8] sm:$0xff]
        %v283 = vld [vmem:[%s230 + $0x10] sm:$0xff]
        %v284 = vld [vmem:[%s230 + $0x18] sm:$0xff]
        %285 = vrot.lane.b32.xlu0 %v281, 1
        %v286 = vpop.permute.xlu0 %285
        %287 = vrot.lane.b32.xlu0 %v283, 1
        %v288 = vpop.permute.xlu0 %287
        %289 = vrot.lane.b32.xlu0 %v282, 1
        %v290 = vpop.permute.xlu0 %289
        %291 = vrot.lane.b32.xlu0 %v284, 1
        %v292 = vpop.permute.xlu0 %291
        %vm293 = vcmp.lt.s32.totalorder %v268, 1
        %v294 = vsel %vm293, %v286, %v290
        %v295 = vsel %vm293, %v288, %v292
        %v296 = vsel %vm293, %v290, %v286
        %v297 = vsel %vm293, %v292, %v288
        %298 = vrot.lane.b32.xlu0 %v281, 127
        %v299 = vpop.permute.xlu0 %298
        %300 = vrot.lane.b32.xlu0 %v283, 127
        %v301 = vpop.permute.xlu0 %300
        %302 = vrot.lane.b32.xlu0 %v282, 127
        %v303 = vpop.permute.xlu0 %302
        %304 = vrot.lane.b32.xlu0 %v284, 127
        %v305 = vpop.permute.xlu0 %304
        %vm306 = vcmp.lt.s32.totalorder %v268, 127
        %v307 = vsel %vm306, %v299, %v303
        %v308 = vsel %vm306, %v301, %v305
        %v309 = vsel %vm306, %v303, %v299
        %v310 = vsel %vm306, %v305, %v301
        %v311 = vsel %vm273, %v307, %v296
        %v312 = vsel %vm274, %v309, %v294
        %v313 = vsel %vm273, %v308, %v297
        %v314 = vsel %vm274, %v310, %v295
        %v315 = vsel %vm275, %v296, %v307
        %v316 = vsel %vm276, %v294, %v309
        %v317 = vsel %vm275, %v297, %v308
        %v318 = vsel %vm276, %v295, %v310
        %319 = vrot.lane.b32.xlu0 %v311, 16
        %v320 = vpop.permute.xlu0 %319
        %321 = vrot.lane.b32.xlu0 %v313, 16
        %v322 = vpop.permute.xlu0 %321
        %323 = vrot.lane.b32.xlu0 %v312, 16
        %v324 = vpop.permute.xlu0 %323
        %325 = vrot.lane.b32.xlu0 %v314, 16
        %v326 = vpop.permute.xlu0 %325
        %v327 = vsel %vm277, %v320, %v324
        %v328 = vsel %vm277, %v322, %v326
        %v329 = vsel %vm277, %v324, %v320
        %v330 = vsel %vm277, %v326, %v322
        %331 = vrot.lane.b32.xlu0 %v311, 112
        %v332 = vpop.permute.xlu0 %331
        %333 = vrot.lane.b32.xlu0 %v313, 112
        %v334 = vpop.permute.xlu0 %333
        %335 = vrot.lane.b32.xlu0 %v312, 112
        %v336 = vpop.permute.xlu0 %335
        %337 = vrot.lane.b32.xlu0 %v314, 112
        %v338 = vpop.permute.xlu0 %337
        %vm339 = vcmp.lt.s32.totalorder %v268, 112
        %v340 = vsel %vm339, %v332, %v336
        %v341 = vsel %vm339, %v334, %v338
        %v342 = vsel %vm339, %v336, %v332
        %v343 = vsel %vm339, %v338, %v334
        %v344 = vsel %vm277, %v340, %v329
        %v345 = vsel %vm278, %v342, %v327
        %v346 = vsel %vm277, %v341, %v330
        %v347 = vsel %vm278, %v343, %v328
        %v348 = vsel %vm279, %v329, %v340
        %v349 = vsel %vm280, %v327, %v342
        %v350 = vsel %vm279, %v330, %v341
        %v351 = vsel %vm280, %v328, %v343
        %v352 = vpack.c.bf16 %v345, %v344
        %v353 = vpack.c.bf16 %v347, %v346
        %354 = vst [vmem:[#allocation2] sm:$0xff] %v352
        %355 = vst [vmem:[#allocation2 + $0x8] sm:$0xff] %v353
        %v356 = vpack.c.bf16 %v312, %v311
        %v357 = vpack.c.bf16 %v314, %v313
        %358 = vst [vmem:[#allocation2 + $0x30] sm:$0xff] %v356
        %359 = vst [vmem:[#allocation2 + $0x38] sm:$0xff] %v357
        %v360 = vpack.c.bf16 %v349, %v348
        %v361 = vpack.c.bf16 %v351, %v350
        %362 = vst [vmem:[#allocation2 + $0x60] sm:$0xff] %v360
        %363 = vst [vmem:[#allocation2 + $0x68] sm:$0xff] %v361
        %364 = vrot.lane.b32.xlu0 %v281, 16
        %v365 = vpop.permute.xlu0 %364
        %366 = vrot.lane.b32.xlu0 %v283, 16
        %v367 = vpop.permute.xlu0 %366
        %368 = vrot.lane.b32.xlu0 %v282, 16
        %v369 = vpop.permute.xlu0 %368
        %370 = vrot.lane.b32.xlu0 %v284, 16
        %v371 = vpop.permute.xlu0 %370
        %v372 = vsel %vm277, %v365, %v369
        %v373 = vsel %vm277, %v367, %v371
        %v374 = vsel %vm277, %v369, %v365
        %v375 = vsel %vm277, %v371, %v367
        %376 = vrot.lane.b32.xlu0 %v281, 112
        %v377 = vpop.permute.xlu0 %376
        %378 = vrot.lane.b32.xlu0 %v283, 112
        %v379 = vpop.permute.xlu0 %378
        %380 = vrot.lane.b32.xlu0 %v282, 112
        %v381 = vpop.permute.xlu0 %380
        %382 = vrot.lane.b32.xlu0 %v284, 112
        %v383 = vpop.permute.xlu0 %382
        %v384 = vsel %vm339, %v377, %v381
        %v385 = vsel %vm339, %v379, %v383
        %v386 = vsel %vm339, %v381, %v377
        %v387 = vsel %vm339, %v383, %v379
        %v388 = vsel %vm277, %v384, %v374
        %v389 = vsel %vm278, %v386, %v372
        %v390 = vsel %vm277, %v385, %v375
        %v391 = vsel %vm278, %v387, %v373
        %v392 = vsel %vm279, %v374, %v384
        %v393 = vsel %vm280, %v372, %v386
        %v394 = vsel %vm279, %v375, %v385
        %v395 = vsel %vm280, %v373, %v387
        %v396 = vpack.c.bf16 %v389, %v388
        %v397 = vpack.c.bf16 %v391, %v390
        %398 = vst [vmem:[#allocation2 + $0x10] sm:$0xff] %v396
        %399 = vst [vmem:[#allocation2 + $0x18] sm:$0xff] %v397
        %v400 = vpack.c.bf16 %v282, %v281
        %v401 = vpack.c.bf16 %v284, %v283
        %402 = vst [vmem:[#allocation2 + $0x40] sm:$0xff] %v400
        %403 = vst [vmem:[#allocation2 + $0x48] sm:$0xff] %v401
        %v404 = vpack.c.bf16 %v393, %v392
        %v405 = vpack.c.bf16 %v395, %v394
        %406 = vst [vmem:[#allocation2 + $0x70] sm:$0xff] %v404
        %407 = vst [vmem:[#allocation2 + $0x78] sm:$0xff] %v405
        %408 = vrot.lane.b32.xlu0 %v315, 16
        %v409 = vpop.permute.xlu0 %408
        %410 = vrot.lane.b32.xlu0 %v317, 16
        %v411 = vpop.permute.xlu0 %410
        %412 = vrot.lane.b32.xlu0 %v316, 16
        %v413 = vpop.permute.xlu0 %412
        %414 = vrot.lane.b32.xlu0 %v318, 16
        %v415 = vpop.permute.xlu0 %414
        %v416 = vsel %vm277, %v409, %v413
        %v417 = vsel %vm277, %v411, %v415
        %v418 = vsel %vm277, %v413, %v409
        %v419 = vsel %vm277, %v415, %v411
        %420 = vrot.lane.b32.xlu0 %v315, 112
        %v421 = vpop.permute.xlu0 %420
        %422 = vrot.lane.b32.xlu0 %v317, 112
        %v423 = vpop.permute.xlu0 %422
        %424 = vrot.lane.b32.xlu0 %v316, 112
        %v425 = vpop.permute.xlu0 %424
        %426 = vrot.lane.b32.xlu0 %v318, 112
        %v427 = vpop.permute.xlu0 %426
        %v428 = vsel %vm339, %v421, %v425
        %v429 = vsel %vm339, %v423, %v427
        %v430 = vsel %vm339, %v425, %v421
        %v431 = vsel %vm339, %v427, %v423
        %v432 = vsel %vm277, %v428, %v418
        %v433 = vsel %vm278, %v430, %v416
        %v434 = vsel %vm277, %v429, %v419
        %v435 = vsel %vm278, %v431, %v417
        %v436 = vsel %vm279, %v418, %v428
        %v437 = vsel %vm280, %v416, %v430
        %v438 = vsel %vm279, %v419, %v429
        %v439 = vsel %vm280, %v417, %v431
        %v440 = vpack.c.bf16 %v433, %v432
        %v441 = vpack.c.bf16 %v435, %v434
        %442 = vst [vmem:[#allocation2 + $0x20] sm:$0xff] %v440
        %443 = vst [vmem:[#allocation2 + $0x28] sm:$0xff] %v441
        %v444 = vpack.c.bf16 %v316, %v315
        %v445 = vpack.c.bf16 %v318, %v317
        %446 = vst [vmem:[#allocation2 + $0x50] sm:$0xff] %v444
        %447 = vst [vmem:[#allocation2 + $0x58] sm:$0xff] %v445
        %v448 = vpack.c.bf16 %v437, %v436
        %v449 = vpack.c.bf16 %v439, %v438
        %450 = vst [vmem:[#allocation2 + $0x80] sm:$0xff] %v448
        %451 = vst [vmem:[#allocation2 + $0x88] sm:$0xff] %v449
        %v452 = vld [vmem:[#allocation8] sm:$0xff]
        %v453 = vld [vmem:[#allocation8 + $0x8] sm:$0xff]
        %v454 = vld [vmem:[#allocation2] sm:$0xff]
        %v455 = vld [vmem:[#allocation2 + $0x8] sm:$0xff]
        %v456 = vld [vmem:[#allocation2 + $0x10] sm:$0xff]
        %v457 = vld [vmem:[#allocation2 + $0x18] sm:$0xff]
        %v458 = vld [vmem:[#allocation2 + $0x20] sm:$0xff]
        %v459 = vld [vmem:[#allocation2 + $0x28] sm:$0xff]
        %v460 = vld [vmem:[#allocation2 + $0x30] sm:$0xff]
        %v461 = vld [vmem:[#allocation2 + $0x38] sm:$0xff]
        %v462 = vld [vmem:[#allocation2 + $0x40] sm:$0xff]
        %v463 = vld [vmem:[#allocation2 + $0x48] sm:$0xff]
        %v464 = vld [vmem:[#allocation2 + $0x50] sm:$0xff]
        %v465 = vld [vmem:[#allocation2 + $0x58] sm:$0xff]
        %v466 = vld [vmem:[#allocation2 + $0x60] sm:$0xff]
        %v467 = vld [vmem:[#allocation2 + $0x68] sm:$0xff]
        %v468 = vld [vmem:[#allocation2 + $0x70] sm:$0xff]
        %v469 = vld [vmem:[#allocation2 + $0x78] sm:$0xff]
        %v470 = vld [vmem:[#allocation2 + $0x80] sm:$0xff]
        %v471 = vld [vmem:[#allocation2 + $0x88] sm:$0xff]
        %v474 = vunpack.c.l.b16 %v452
        %v475 = vunpack.c.h.b16 %v452
        %v476 = vunpack.c.l.b16 %v453
        %v477 = vunpack.c.h.b16 %v453
        %v478 = vpack.c.b16 %v476, %v474
        %v479 = vpack.c.b16 %v477, %v475
        %v499 = vunpack.c.l.b16 %v454
        %v500 = vunpack.c.h.b16 %v454
        %v501 = vunpack.c.l.b16 %v455
        %v502 = vunpack.c.h.b16 %v455
        %v503 = vunpack.c.l.b16 %v456
        %v504 = vunpack.c.h.b16 %v456
        %v505 = vunpack.c.l.b16 %v457
        %v506 = vunpack.c.h.b16 %v457
        %v507 = vunpack.c.l.b16 %v458
        %v508 = vunpack.c.h.b16 %v458
        %v509 = vunpack.c.l.b16 %v459
        %v510 = vunpack.c.h.b16 %v459
        %v511 = vunpack.c.l.b16 %v460
        %v512 = vunpack.c.h.b16 %v460
        %v513 = vunpack.c.l.b16 %v461
        %v514 = vunpack.c.h.b16 %v461
        %v515 = vunpack.c.l.b16 %v462
        %v516 = vunpack.c.h.b16 %v462
        %v517 = vunpack.c.l.b16 %v463
        %v518 = vunpack.c.h.b16 %v463
        %v519 = vunpack.c.l.b16 %v464
        %v520 = vunpack.c.h.b16 %v464
        %v521 = vunpack.c.l.b16 %v465
        %v522 = vunpack.c.h.b16 %v465
        %v523 = vunpack.c.l.b16 %v466
        %v524 = vunpack.c.h.b16 %v466
        %v525 = vunpack.c.l.b16 %v467
        %v526 = vunpack.c.h.b16 %v467
        %v527 = vunpack.c.l.b16 %v468
        %v528 = vunpack.c.h.b16 %v468
        %v529 = vunpack.c.l.b16 %v469
        %v530 = vunpack.c.h.b16 %v469
        %v531 = vunpack.c.l.b16 %v470
        %v532 = vunpack.c.h.b16 %v470
        %v533 = vunpack.c.l.b16 %v471
        %v534 = vunpack.c.h.b16 %v471
        %v535 = vpack.c.b16 %v501, %v499
        %v536 = vpack.c.b16 %v502, %v500
        %v537 = vpack.c.b16 %v505, %v503
        %v538 = vpack.c.b16 %v506, %v504
        %v539 = vpack.c.b16 %v509, %v507
        %v540 = vpack.c.b16 %v510, %v508
        %v541 = vpack.c.b16 %v513, %v511
        %v542 = vpack.c.b16 %v514, %v512
        %v543 = vpack.c.b16 %v517, %v515
        %v544 = vpack.c.b16 %v518, %v516
        %v545 = vpack.c.b16 %v521, %v519
        %v546 = vpack.c.b16 %v522, %v520
        %v547 = vpack.c.b16 %v525, %v523
        %v548 = vpack.c.b16 %v526, %v524
        %v549 = vpack.c.b16 %v529, %v527
        %v550 = vpack.c.b16 %v530, %v528
        %v551 = vpack.c.b16 %v533, %v531
        %v552 = vpack.c.b16 %v534, %v532
        %vm571 = vcmask 130048
        %v573 = vsel %vm571, %v479, 0
        %575 = vmatpush.bf16.msra.mxu0 %v549
        %576 = vmatpush.bf16.msra.mxu0 %v547
        %577 = vmatpush.bf16.msra.mxu0 %v545
        %578 = vmatpush.bf16.msra.mxu0 %v543
        %579 = vmatpush.bf16.msra.mxu0 %v541
        %580 = vmatpush.bf16.msra.mxu0 %v539
        %581 = vmatpush.bf16.msra.mxu0 %v537
        %582 = vmatpush.bf16.msra.mxu0 %v535
        %583 = vmatmul.bf16.gmra.mxu0 %v478
        %v584 = vpop.f32.mrf.mxu0
        %v585 = vadd.f32 0.0, %v584
        %v586 = vpop.f32.mrf.mxu0
        %v587 = vadd.f32 0.0, %v586
        %588 = vdwg.mxu0
        %589 = vmatpush.bf16.msra.mxu0 0
        %590 = vmatpush.bf16.msra.mxu0 0
        %591 = vmatpush.bf16.msra.mxu0 0
        %592 = vmatpush.bf16.msra.mxu0 0
        %593 = vmatpush.bf16.msra.mxu0 0
        %594 = vmatpush.bf16.msra.mxu0 0
        %595 = vmatpush.bf16.msra.mxu0 0
        %596 = vmatpush.bf16.msra.mxu0 %v551
        %597 = vmatmul.bf16.gmra.mxu0 %v573
        %v598 = vpop.f32.mrf.mxu0
        %v599 = vadd.f32 %v585, %v598
        %v600 = vpop.f32.mrf.mxu0
        %v601 = vadd.f32 %v587, %v600
        %602 = vdwg.mxu0
        %603 = vmatpush.bf16.msra.mxu0 %v550
        %604 = vmatpush.bf16.msra.mxu0 %v548
        %605 = vmatpush.bf16.msra.mxu0 %v546
        %606 = vmatpush.bf16.msra.mxu0 %v544
        %607 = vmatpush.bf16.msra.mxu0 %v542
        %608 = vmatpush.bf16.msra.mxu0 %v540
        %609 = vmatpush.bf16.msra.mxu0 %v538
        %610 = vmatpush.bf16.msra.mxu0 %v536
        %611 = vmatmul.bf16.gmra.mxu0 %v478
        %v612 = vpop.f32.mrf.mxu0
        %v613 = vadd.f32 0.0, %v612
        %v614 = vpop.f32.mrf.mxu0
        %v615 = vadd.f32 0.0, %v614
        %616 = vdwg.mxu0
        %617 = vmatpush.bf16.msra.mxu0 0
        %618 = vmatpush.bf16.msra.mxu0 0
        %619 = vmatpush.bf16.msra.mxu0 0
        %620 = vmatpush.bf16.msra.mxu0 0
        %621 = vmatpush.bf16.msra.mxu0 0
        %622 = vmatpush.bf16.msra.mxu0 0
        %623 = vmatpush.bf16.msra.mxu0 0
        %624 = vmatpush.bf16.msra.mxu0 %v552
        %625 = vmatmul.bf16.gmra.mxu0 %v573
        %v626 = vpop.f32.mrf.mxu0
        %v627 = vadd.f32 %v613, %v626
        %v628 = vpop.f32.mrf.mxu0
        %v629 = vadd.f32 %v615, %v628
        %630 = vdwg.mxu0
        %v631 = vadd.f32 %v599, %v627
        %632 = vadd.xlane.f32.xlu0 %v631
        %v633 = vpop.xlane.xlu0 %632
        %v634 = vadd.f32 %v601, %v629
        %635 = vadd.xlane.f32.xlu0 %v634
        %v636 = vpop.xlane.xlu0 %635
        %v637 = vmul.f32 %v633, 0.00390625
        %v638 = vmul.f32 %v636, 0.00390625
        %v639 = vsub.f32 %v599, %v637
        %v640 = vsub.f32 %v627, %v637
        %v641 = vsub.f32 %v601, %v638
        %v642 = vsub.f32 %v629, %v638
        %v643 = vmul.f32 %v639, %v639
        %v644 = vmul.f32 %v640, %v640
        %v645 = vmul.f32 %v641, %v641
        %v646 = vmul.f32 %v642, %v642
        %v647 = vadd.f32 %v643, %v644
        %648 = vadd.xlane.f32.xlu0 %v647
        %v649 = vpop.xlane.xlu0 %648
        %v650 = vadd.f32 %v645, %v646
        %651 = vadd.xlane.f32.xlu0 %v650
        %v652 = vpop.xlane.xlu0 %651
        %v653 = vmul.f32 %v649, 0.00390625
        %v654 = vmul.f32 %v652, 0.00390625
        %v655 = vadd.f32 %v653, 1e-05
        %v656 = vadd.f32 %v654, 1e-05
        %v657 = vrsqrt.pop %v655
        %v658 = vmul.f32 %v657, %v655
        %v659 = vmul.f32 %v658, %v657
        %v660 = vmul.f32 0.5, %v659
        %v661 = vsub.f32 1.5, %v660
        %v662 = vmul.f32 %v657, %v661
        %vm663 = vweird.f32 %v655
        %vm664 = vweird.f32 %v657
        %vm665 = vmor %vm663, %vm664
        %v666 = vsel %vm665, %v657, %v662
        %v667 = vrsqrt.pop %v656
        %v668 = vmul.f32 %v667, %v656
        %v669 = vmul.f32 %v668, %v667
        %v670 = vmul.f32 0.5, %v669
        %v671 = vsub.f32 1.5, %v670
        %v672 = vmul.f32 %v667, %v671
        %vm673 = vweird.f32 %v656
        %vm674 = vweird.f32 %v667
        %vm675 = vmor %vm673, %vm674
        %v676 = vsel %vm675, %v667, %v672
        %v677 = vmul.f32 %v639, %v666
        %v678 = vmul.f32 %v640, %v666
        %v679 = vmul.f32 %v641, %v676
        %v680 = vmul.f32 %v642, %v676
        %v681 = vmax.f32 %v677, 0.0
        %v682 = vmax.f32 %v678, 0.0
        %v683 = vmax.f32 %v679, 0.0
        %v684 = vmax.f32 %v680, 0.0
        %685 = vrot.lane.b32.xlu0 %v681, 1
        %v686 = vpop.permute.xlu0 %685
        %687 = vrot.lane.b32.xlu0 %v683, 1
        %v688 = vpop.permute.xlu0 %687
        %689 = vrot.lane.b32.xlu0 %v682, 1
        %v690 = vpop.permute.xlu0 %689
        %691 = vrot.lane.b32.xlu0 %v684, 1
        %v692 = vpop.permute.xlu0 %691
        %v693 = vsel %vm293, %v686, %v690
        %v694 = vsel %vm293, %v688, %v692
        %v695 = vsel %vm293, %v690, %v686
        %v696 = vsel %vm293, %v692, %v688
        %697 = vrot.lane.b32.xlu0 %v681, 127
        %v698 = vpop.permute.xlu0 %697
        %699 = vrot.lane.b32.xlu0 %v683, 127
        %v700 = vpop.permute.xlu0 %699
        %701 = vrot.lane.b32.xlu0 %v682, 127
        %v702 = vpop.permute.xlu0 %701
        %703 = vrot.lane.b32.xlu0 %v684, 127
        %v704 = vpop.permute.xlu0 %703
        %v705 = vsel %vm306, %v698, %v702
        %v706 = vsel %vm306, %v700, %v704
        %v707 = vsel %vm306, %v702, %v698
        %v708 = vsel %vm306, %v704, %v700
        %v709 = vsel %vm273, %v705, %v695
        %v710 = vsel %vm274, %v707, %v693
        %v711 = vsel %vm273, %v706, %v696
        %v712 = vsel %vm274, %v708, %v694
        %v713 = vsel %vm275, %v695, %v705
        %v714 = vsel %vm276, %v693, %v707
        %v715 = vsel %vm275, %v696, %v706
        %v716 = vsel %vm276, %v694, %v708
        %717 = vrot.lane.b32.xlu0 %v709, 16
        %v718 = vpop.permute.xlu0 %717
        %719 = vrot.lane.b32.xlu0 %v711, 16
        %v720 = vpop.permute.xlu0 %719
        %721 = vrot.lane.b32.xlu0 %v710, 16
        %v722 = vpop.permute.xlu0 %721
        %723 = vrot.lane.b32.xlu0 %v712, 16
        %v724 = vpop.permute.xlu0 %723
        %v725 = vsel %vm277, %v718, %v722
        %v726 = vsel %vm277, %v720, %v724
        %v727 = vsel %vm277, %v722, %v718
        %v728 = vsel %vm277, %v724, %v720
        %729 = vrot.lane.b32.xlu0 %v709, 112
        %v730 = vpop.permute.xlu0 %729
        %731 = vrot.lane.b32.xlu0 %v711, 112
        %v732 = vpop.permute.xlu0 %731
        %733 = vrot.lane.b32.xlu0 %v710, 112
        %v734 = vpop.permute.xlu0 %733
        %735 = vrot.lane.b32.xlu0 %v712, 112
        %v736 = vpop.permute.xlu0 %735
        %v737 = vsel %vm339, %v730, %v734
        %v738 = vsel %vm339, %v732, %v736
        %v739 = vsel %vm339, %v734, %v730
        %v740 = vsel %vm339, %v736, %v732
        %v741 = vsel %vm277, %v737, %v727
        %v742 = vsel %vm278, %v739, %v725
        %v743 = vsel %vm277, %v738, %v728
        %v744 = vsel %vm278, %v740, %v726
        %v745 = vsel %vm279, %v727, %v737
        %v746 = vsel %vm280, %v725, %v739
        %v747 = vsel %vm279, %v728, %v738
        %v748 = vsel %vm280, %v726, %v740
        %v749 = vpack.c.bf16 %v742, %v741
        %v750 = vpack.c.bf16 %v744, %v743
        %751 = vst [vmem:[#allocation2] sm:$0xff] %v749
        %752 = vst [vmem:[#allocation2 + $0x8] sm:$0xff] %v750
        %v753 = vpack.c.bf16 %v710, %v709
        %v754 = vpack.c.bf16 %v712, %v711
        %755 = vst [vmem:[#allocation2 + $0x30] sm:$0xff] %v753
        %756 = vst [vmem:[#allocation2 + $0x38] sm:$0xff] %v754
        %v757 = vpack.c.bf16 %v746, %v745
        %v758 = vpack.c.bf16 %v748, %v747
        %759 = vst [vmem:[#allocation2 + $0x60] sm:$0xff] %v757
        %760 = vst [vmem:[#allocation2 + $0x68] sm:$0xff] %v758
        %761 = vrot.lane.b32.xlu0 %v681, 16
        %v762 = vpop.permute.xlu0 %761
        %763 = vrot.lane.b32.xlu0 %v683, 16
        %v764 = vpop.permute.xlu0 %763
        %765 = vrot.lane.b32.xlu0 %v682, 16
        %v766 = vpop.permute.xlu0 %765
        %767 = vrot.lane.b32.xlu0 %v684, 16
        %v768 = vpop.permute.xlu0 %767
        %v769 = vsel %vm277, %v762, %v766
        %v770 = vsel %vm277, %v764, %v768
        %v771 = vsel %vm277, %v766, %v762
        %v772 = vsel %vm277, %v768, %v764
        %773 = vrot.lane.b32.xlu0 %v681, 112
        %v774 = vpop.permute.xlu0 %773
        %775 = vrot.lane.b32.xlu0 %v683, 112
        %v776 = vpop.permute.xlu0 %775
        %777 = vrot.lane.b32.xlu0 %v682, 112
        %v778 = vpop.permute.xlu0 %777
        %779 = vrot.lane.b32.xlu0 %v684, 112
        %v780 = vpop.permute.xlu0 %779
        %v781 = vsel %vm339, %v774, %v778
        %v782 = vsel %vm339, %v776, %v780
        %v783 = vsel %vm339, %v778, %v774
        %v784 = vsel %vm339, %v780, %v776
        %v785 = vsel %vm277, %v781, %v771
        %v786 = vsel %vm278, %v783, %v769
        %v787 = vsel %vm277, %v782, %v772
        %v788 = vsel %vm278, %v784, %v770
        %v789 = vsel %vm279, %v771, %v781
        %v790 = vsel %vm280, %v769, %v783
        %v791 = vsel %vm279, %v772, %v782
        %v792 = vsel %vm280, %v770, %v784
        %v793 = vpack.c.bf16 %v786, %v785
        %v794 = vpack.c.bf16 %v788, %v787
        %795 = vst [vmem:[#allocation2 + $0x10] sm:$0xff] %v793
        %796 = vst [vmem:[#allocation2 + $0x18] sm:$0xff] %v794
        %v797 = vpack.c.bf16 %v682, %v681
        %v798 = vpack.c.bf16 %v684, %v683
        %799 = vst [vmem:[#allocation2 + $0x40] sm:$0xff] %v797
        %800 = vst [vmem:[#allocation2 + $0x48] sm:$0xff] %v798
        %v801 = vpack.c.bf16 %v790, %v789
        %v802 = vpack.c.bf16 %v792, %v791
        %803 = vst [vmem:[#allocation2 + $0x70] sm:$0xff] %v801
        %804 = vst [vmem:[#allocation2 + $0x78] sm:$0xff] %v802
        %805 = vrot.lane.b32.xlu0 %v713, 16
        %v806 = vpop.permute.xlu0 %805
        %807 = vrot.lane.b32.xlu0 %v715, 16
        %v808 = vpop.permute.xlu0 %807
        %809 = vrot.lane.b32.xlu0 %v714, 16
        %v810 = vpop.permute.xlu0 %809
        %811 = vrot.lane.b32.xlu0 %v716, 16
        %v812 = vpop.permute.xlu0 %811
        %v813 = vsel %vm277, %v806, %v810
        %v814 = vsel %vm277, %v808, %v812
        %v815 = vsel %vm277, %v810, %v806
        %v816 = vsel %vm277, %v812, %v808
        %817 = vrot.lane.b32.xlu0 %v713, 112
        %v818 = vpop.permute.xlu0 %817
        %819 = vrot.lane.b32.xlu0 %v715, 112
        %v820 = vpop.permute.xlu0 %819
        %821 = vrot.lane.b32.xlu0 %v714, 112
        %v822 = vpop.permute.xlu0 %821
        %823 = vrot.lane.b32.xlu0 %v716, 112
        %v824 = vpop.permute.xlu0 %823
        %v825 = vsel %vm339, %v818, %v822
        %v826 = vsel %vm339, %v820, %v824
        %v827 = vsel %vm339, %v822, %v818
        %v828 = vsel %vm339, %v824, %v820
        %v829 = vsel %vm277, %v825, %v815
        %v830 = vsel %vm278, %v827, %v813
        %v831 = vsel %vm277, %v826, %v816
        %v832 = vsel %vm278, %v828, %v814
        %v833 = vsel %vm279, %v815, %v825
        %v834 = vsel %vm280, %v813, %v827
        %v835 = vsel %vm279, %v816, %v826
        %v836 = vsel %vm280, %v814, %v828
        %v837 = vpack.c.bf16 %v830, %v829
        %v838 = vpack.c.bf16 %v832, %v831
        %839 = vst [vmem:[#allocation2 + $0x20] sm:$0xff] %v837
        %840 = vst [vmem:[#allocation2 + $0x28] sm:$0xff] %v838
        %v841 = vpack.c.bf16 %v714, %v713
        %v842 = vpack.c.bf16 %v716, %v715
        %843 = vst [vmem:[#allocation2 + $0x50] sm:$0xff] %v841
        %844 = vst [vmem:[#allocation2 + $0x58] sm:$0xff] %v842
        %v845 = vpack.c.bf16 %v834, %v833
        %v846 = vpack.c.bf16 %v836, %v835
        %847 = vst [vmem:[#allocation2 + $0x80] sm:$0xff] %v845
        %848 = vst [vmem:[#allocation2 + $0x88] sm:$0xff] %v846
        %v849 = vld [vmem:[#allocation9] sm:$0xff]
        %v850 = vld [vmem:[#allocation9 + $0x8] sm:$0xff]
        %v851 = vld [vmem:[#allocation2] sm:$0xff]
        %v852 = vld [vmem:[#allocation2 + $0x8] sm:$0xff]
        %v853 = vld [vmem:[#allocation2 + $0x10] sm:$0xff]
        %v854 = vld [vmem:[#allocation2 + $0x18] sm:$0xff]
        %v855 = vld [vmem:[#allocation2 + $0x20] sm:$0xff]
        %v856 = vld [vmem:[#allocation2 + $0x28] sm:$0xff]
        %v857 = vld [vmem:[#allocation2 + $0x30] sm:$0xff]
        %v858 = vld [vmem:[#allocation2 + $0x38] sm:$0xff]
        %v859 = vld [vmem:[#allocation2 + $0x40] sm:$0xff]
        %v860 = vld [vmem:[#allocation2 + $0x48] sm:$0xff]
        %v861 = vld [vmem:[#allocation2 + $0x50] sm:$0xff]
        %v862 = vld [vmem:[#allocation2 + $0x58] sm:$0xff]
        %v863 = vld [vmem:[#allocation2 + $0x60] sm:$0xff]
        %v864 = vld [vmem:[#allocation2 + $0x68] sm:$0xff]
        %v865 = vld [vmem:[#allocation2 + $0x70] sm:$0xff]
        %v866 = vld [vmem:[#allocation2 + $0x78] sm:$0xff]
        %v867 = vld [vmem:[#allocation2 + $0x80] sm:$0xff]
        %v868 = vld [vmem:[#allocation2 + $0x88] sm:$0xff]
        %v871 = vunpack.c.l.b16 %v849
        %v872 = vunpack.c.h.b16 %v849
        %v873 = vunpack.c.l.b16 %v850
        %v874 = vunpack.c.h.b16 %v850
        %v875 = vpack.c.b16 %v873, %v871
        %v876 = vpack.c.b16 %v874, %v872
        %v896 = vunpack.c.l.b16 %v851
        %v897 = vunpack.c.h.b16 %v851
        %v898 = vunpack.c.l.b16 %v852
        %v899 = vunpack.c.h.b16 %v852
        %v900 = vunpack.c.l.b16 %v853
        %v901 = vunpack.c.h.b16 %v853
        %v902 = vunpack.c.l.b16 %v854
        %v903 = vunpack.c.h.b16 %v854
        %v904 = vunpack.c.l.b16 %v855
        %v905 = vunpack.c.h.b16 %v855
        %v906 = vunpack.c.l.b16 %v856
        %v907 = vunpack.c.h.b16 %v856
        %v908 = vunpack.c.l.b16 %v857
        %v909 = vunpack.c.h.b16 %v857
        %v910 = vunpack.c.l.b16 %v858
        %v911 = vunpack.c.h.b16 %v858
        %v912 = vunpack.c.l.b16 %v859
        %v913 = vunpack.c.h.b16 %v859
        %v914 = vunpack.c.l.b16 %v860
        %v915 = vunpack.c.h.b16 %v860
        %v916 = vunpack.c.l.b16 %v861
        %v917 = vunpack.c.h.b16 %v861
        %v918 = vunpack.c.l.b16 %v862
        %v919 = vunpack.c.h.b16 %v862
        %v920 = vunpack.c.l.b16 %v863
        %v921 = vunpack.c.h.b16 %v863
        %v922 = vunpack.c.l.b16 %v864
        %v923 = vunpack.c.h.b16 %v864
        %v924 = vunpack.c.l.b16 %v865
        %v925 = vunpack.c.h.b16 %v865
        %v926 = vunpack.c.l.b16 %v866
        %v927 = vunpack.c.h.b16 %v866
        %v928 = vunpack.c.l.b16 %v867
        %v929 = vunpack.c.h.b16 %v867
        %v930 = vunpack.c.l.b16 %v868
        %v931 = vunpack.c.h.b16 %v868
        %v932 = vpack.c.b16 %v898, %v896
        %v933 = vpack.c.b16 %v899, %v897
        %v934 = vpack.c.b16 %v902, %v900
        %v935 = vpack.c.b16 %v903, %v901
        %v936 = vpack.c.b16 %v906, %v904
        %v937 = vpack.c.b16 %v907, %v905
        %v938 = vpack.c.b16 %v910, %v908
        %v939 = vpack.c.b16 %v911, %v909
        %v940 = vpack.c.b16 %v914, %v912
        %v941 = vpack.c.b16 %v915, %v913
        %v942 = vpack.c.b16 %v918, %v916
        %v943 = vpack.c.b16 %v919, %v917
        %v944 = vpack.c.b16 %v922, %v920
        %v945 = vpack.c.b16 %v923, %v921
        %v946 = vpack.c.b16 %v926, %v924
        %v947 = vpack.c.b16 %v927, %v925
        %v948 = vpack.c.b16 %v930, %v928
        %v949 = vpack.c.b16 %v931, %v929
        %v969 = vsel %vm571, %v876, 0
        %971 = vmatpush.bf16.msra.mxu0 %v946
        %972 = vmatpush.bf16.msra.mxu0 %v944
        %973 = vmatpush.bf16.msra.mxu0 %v942
        %974 = vmatpush.bf16.msra.mxu0 %v940
        %975 = vmatpush.bf16.msra.mxu0 %v938
        %976 = vmatpush.bf16.msra.mxu0 %v936
        %977 = vmatpush.bf16.msra.mxu0 %v934
        %978 = vmatpush.bf16.msra.mxu0 %v932
        %979 = vmatmul.bf16.gmra.mxu0 %v875
        %v980 = vpop.f32.mrf.mxu0
        %v981 = vadd.f32 0.0, %v980
        %v982 = vpop.f32.mrf.mxu0
        %v983 = vadd.f32 0.0, %v982
        %984 = vdwg.mxu0
        %985 = vmatpush.bf16.msra.mxu0 0
        %986 = vmatpush.bf16.msra.mxu0 0
        %987 = vmatpush.bf16.msra.mxu0 0
        %988 = vmatpush.bf16.msra.mxu0 0
        %989 = vmatpush.bf16.msra.mxu0 0
        %990 = vmatpush.bf16.msra.mxu0 0
        %991 = vmatpush.bf16.msra.mxu0 0
        %992 = vmatpush.bf16.msra.mxu0 %v948
        %993 = vmatmul.bf16.gmra.mxu0 %v969
        %v994 = vpop.f32.mrf.mxu0
        %v995 = vadd.f32 %v981, %v994
        %v996 = vpop.f32.mrf.mxu0
        %v997 = vadd.f32 %v983, %v996
        %998 = vdwg.mxu0
        %999 = vmatpush.bf16.msra.mxu0 %v947
        %1000 = vmatpush.bf16.msra.mxu0 %v945
        %1001 = vmatpush.bf16.msra.mxu0 %v943
        %1002 = vmatpush.bf16.msra.mxu0 %v941
        %1003 = vmatpush.bf16.msra.mxu0 %v939
        %1004 = vmatpush.bf16.msra.mxu0 %v937
        %1005 = vmatpush.bf16.msra.mxu0 %v935
        %1006 = vmatpush.bf16.msra.mxu0 %v933
        %1007 = vmatmul.bf16.gmra.mxu0 %v875
        %v1008 = vpop.f32.mrf.mxu0
        %v1009 = vadd.f32 0.0, %v1008
        %v1010 = vpop.f32.mrf.mxu0
        %v1011 = vadd.f32 0.0, %v1010
        %1012 = vdwg.mxu0
        %1013 = vmatpush.bf16.msra.mxu0 0
        %1014 = vmatpush.bf16.msra.mxu0 0
        %1015 = vmatpush.bf16.msra.mxu0 0
        %1016 = vmatpush.bf16.msra.mxu0 0
        %1017 = vmatpush.bf16.msra.mxu0 0
        %1018 = vmatpush.bf16.msra.mxu0 0
        %1019 = vmatpush.bf16.msra.mxu0 0
        %1020 = vmatpush.bf16.msra.mxu0 %v949
        %1021 = vmatmul.bf16.gmra.mxu0 %v969
        %v1022 = vpop.f32.mrf.mxu0
        %v1023 = vadd.f32 %v1009, %v1022
        %v1024 = vpop.f32.mrf.mxu0
        %v1025 = vadd.f32 %v1011, %v1024
        %1026 = vdwg.mxu0
        %v1027 = vadd.f32 %v995, %v1023
        %1028 = vadd.xlane.f32.xlu0 %v1027
        %v1029 = vpop.xlane.xlu0 %1028
        %v1030 = vadd.f32 %v997, %v1025
        %1031 = vadd.xlane.f32.xlu0 %v1030
        %v1032 = vpop.xlane.xlu0 %1031
        %v1033 = vmul.f32 %v1029, 0.00390625
        %v1034 = vmul.f32 %v1032, 0.00390625
        %v1035 = vsub.f32 %v995, %v1033
        %v1036 = vsub.f32 %v1023, %v1033
        %v1037 = vsub.f32 %v997, %v1034
        %v1038 = vsub.f32 %v1025, %v1034
        %v1039 = vmul.f32 %v1035, %v1035
        %v1040 = vmul.f32 %v1036, %v1036
        %v1041 = vmul.f32 %v1037, %v1037
        %v1042 = vmul.f32 %v1038, %v1038
        %v1043 = vadd.f32 %v1039, %v1040
        %1044 = vadd.xlane.f32.xlu0 %v1043
        %v1045 = vpop.xlane.xlu0 %1044
        %v1046 = vadd.f32 %v1041, %v1042
        %1047 = vadd.xlane.f32.xlu0 %v1046
        %v1048 = vpop.xlane.xlu0 %1047
        %v1049 = vmul.f32 %v1045, 0.00390625
        %v1050 = vmul.f32 %v1048, 0.00390625
        %v1051 = vadd.f32 %v1049, 1e-05
        %v1052 = vadd.f32 %v1050, 1e-05
        %v1053 = vrsqrt.pop %v1051
        %v1054 = vmul.f32 %v1053, %v1051
        %v1055 = vmul.f32 %v1054, %v1053
        %v1056 = vmul.f32 0.5, %v1055
        %v1057 = vsub.f32 1.5, %v1056
        %v1058 = vmul.f32 %v1053, %v1057
        %vm1059 = vweird.f32 %v1051
        %vm1060 = vweird.f32 %v1053
        %vm1061 = vmor %vm1059, %vm1060
        %v1062 = vsel %vm1061, %v1053, %v1058
        %v1063 = vrsqrt.pop %v1052
        %v1064 = vmul.f32 %v1063, %v1052
        %v1065 = vmul.f32 %v1064, %v1063
        %v1066 = vmul.f32 0.5, %v1065
        %v1067 = vsub.f32 1.5, %v1066
        %v1068 = vmul.f32 %v1063, %v1067
        %vm1069 = vweird.f32 %v1052
        %vm1070 = vweird.f32 %v1063
        %vm1071 = vmor %vm1069, %vm1070
        %v1072 = vsel %vm1071, %v1063, %v1068
        %v1073 = vmul.f32 %v1035, %v1062
        %v1074 = vmul.f32 %v1036, %v1062
        %v1075 = vmul.f32 %v1037, %v1072
        %v1076 = vmul.f32 %v1038, %v1072
        %v1077 = vld [vmem:[%s230] sm:$0xff]
        %v1078 = vld [vmem:[%s230 + $0x8] sm:$0xff]
        %v1079 = vld [vmem:[%s230 + $0x10] sm:$0xff]
        %v1080 = vld [vmem:[%s230 + $0x18] sm:$0xff]
        %v1081 = vadd.f32 %v1077, %v1073
        %v1082 = vadd.f32 %v1078, %v1074
        %v1083 = vadd.f32 %v1079, %v1075
        %v1084 = vadd.f32 %v1080, %v1076
        %1085 = vst [vmem:[%s265] sm:$0xff] %v1081
        %1086 = vst [vmem:[%s265 + $0x8] sm:$0xff] %v1082
        %1087 = vst [vmem:[%s265 + $0x10] sm:$0xff] %v1083
        %1088 = vst [vmem:[%s265 + $0x18] sm:$0xff] %v1084
        %s1089 = sand.u32 %s120, 1
        %s1090 = scalar_lea.sflag [#allocation5], %s1089
        %s1091 = sand.u32 %s120, 1
        %s1092 = smul.addr %s1091, 32
        %s1093 = scalar_lea.vmem [#allocation11], %s1092
        // Predicated region
        $region53: #{tpu_custom_call.1} parent=35 // pred_check
          %p1094 = pneg %p130
        $region54: #{tpu_custom_call.1} parent=35 // pred_check_branch
          %1096 = sbr.rel (%p1094) target = $region56
        $region55: #{tpu_custom_call.1} parent=35 // pred_region
          %1098 = vsyncadd %s1090, 0
          %s1099 = smul.addr %s23, 4
          %s1100 = smul.addr %s1099, 8
          %s1101 = scalar_lea.hbm %s4, %s1100
          %s1102 = sshll.u32 %s1093, 4
          %s1103 = int_to_ptr.vmem [resolvable:$true] %s1102
          %s1104 = sshll.u32 %s1101, 4
          %s1105 = int_to_ptr.hbm [resolvable:$true] %s1104
          %1110 = dma.vmem_to_hbm [thread:$0]  %s1103, 512, %s1105, %s1090, 256, 256, 16
        $region56: #{tpu_custom_call.1} parent=35 // pred_fallthru
          _
      $region36: #{tpu_custom_call.1} parent=5 // pred_fallthru
        _
      %p1111 = scmp.le.s32.totalorder 2, %s18
      // Predicated region
      $region57: #{tpu_custom_call.1} parent=5 // pred_check
        %p1112 = pneg %p1111
      $region58: #{tpu_custom_call.1} parent=5 // pred_check_branch
        %1114 = sbr.rel (%p1112) target = $region60
      $region59: #{tpu_custom_call.1} parent=5 // pred_region
        %s1115 = ssub.s32 %s18, 2
        // Predicated region
        $region61: #{tpu_custom_call.1} parent=59 // pred_check
          %p1116 = pneg %p136
        $region62: #{tpu_custom_call.1} parent=59 // pred_check_branch
          %1118 = sbr.rel (%p1116) target = $region64
        $region63: #{tpu_custom_call.1} parent=59 // pred_region
          %s1119 = sand.u32 %s121, 1
          %s1120 = scalar_lea.sflag [#allocation5], %s1119
          %s1121 = sand.u32 %s121, 1
          %s1122 = smul.addr %s1121, 32
          %s1123 = scalar_lea.vmem [#allocation11], %s1122
          %1125 = dma.done %s1120, 512
        $region64: #{tpu_custom_call.1} parent=59 // pred_fallthru
          _
      $region60: #{tpu_custom_call.1} parent=5 // pred_fallthru
        _
    $region6: #{tpu_custom_call.1} parent=1 // loop_footer
      %s22 = sadd.s32 1, %s18
    $region7: #{tpu_custom_call.1} parent=1 // loop_footer_branch
      %17 = sbr.rel target = $region3
    $region8: #{tpu_custom_call.1} parent=1 // loop_exit
      _
    %1126 = vsyncpa [#allocation4], 1
    %s1127 = scalar_lea.sflag [#allocation4], 1
    %1128 = vsyncpa %s1127, 1
    %1129 = vsyncpa [#allocation7], 1
    %s1130 = scalar_lea.sflag [#allocation7], 1
    %1131 = vsyncpa %s1130, 1
    %1132 = vsyncpa [#allocation10], 1
    %1133 = vsyncpa [#allocation5], 1
    %s1134 = scalar_lea.sflag [#allocation5], 1
    %1135 = vsyncpa %s1134, 1

</llo_original>
